<compile_context>
chip_gen: v5e
topology: v5e:2x2
jax: 0.10.0
libtpu: 0.0.40
codegen_flags: <defaults>
</compile_context>

<pallas_src>
import jax
import jax.numpy as jnp
from jax.experimental import pallas as pl
from jax.experimental.pallas import tpu as pltpu


def attention_kernel(eo_ref, fp_ref, w1a_ref, w1b_ref, b1_ref, w2_ref, out_ref):
    # eo_ref, fp_ref: (TB, S, F)        -- encoder_output / encoder_first_pose tiles
    # w1a_ref, w1b_ref: (F, 2F)         -- top / bottom halves of W1 (input-major)
    # b1_ref:  (1, 2F)
    # w2_ref:  (1, 2F)                  -- second Linear's weight as a row vector
    # out_ref: (TB, 2F)
    tb, s, f = eo_ref.shape

    # Weights / activations loaded once per step (weights stay VMEM-resident
    # across steps because their index_map is constant).
    eo = eo_ref[...]
    fp = fp_ref[...]
    w1a = w1a_ref[...]
    w1b = w1b_ref[...]
    b1 = b1_ref[...]
    w2r = w2_ref[...]

    # First Linear on the (implicit) concatenation, flattened so the MXU sees
    # M = TB*S rows at once:
    #   tanh([eo, fp] @ W1 + b1) == tanh(eo @ W1[:F] + fp @ W1[F:] + b1)
    eo2 = eo.reshape(tb * s, f)
    fp2 = fp.reshape(tb * s, f)
    h = jnp.tanh(
        jnp.dot(eo2, w1a, preferred_element_type=jnp.float32)
        + jnp.dot(fp2, w1b, preferred_element_type=jnp.float32)
        + b1
    )                                                          # (TB*S, 2F)

    # Second Linear has a single output column: do it as a VPU multiply plus a
    # lane reduction instead of an N=1 MXU matmul.  b2 cancels in the softmax.
    h3 = h.reshape(tb, s, 2 * f)
    logits = jnp.sum(h3 * w2r, axis=-1, keepdims=True)         # (TB, S, 1)

    # Softmax over the sequence axis, independently per batch row.
    m = jnp.max(logits, axis=1, keepdims=True)                 # (TB, 1, 1)
    e = jnp.exp(logits - m)
    w = e / jnp.sum(e, axis=1, keepdims=True)                  # (TB, S, 1)

    # Weighted sum over the sequence axis, written as the two halves of the
    # concatenated feature vector.
    out_ref[:, :f] = jnp.sum(w * eo, axis=1)                   # (TB, F)
    out_ref[:, f:] = jnp.sum(w * fp, axis=1)                   # (TB, F)


def attention_forward(encoder_output, encoder_first_pose, w1, b1, w2, b2=None,
                      *, tb=None):
    """encoder_output, encoder_first_pose: (B, S, F) float32 -> (B, 2F).

    w1: (2F, 2F), b1: (1, 2F), w2: (2F, 1) -- stored input-major (i.e. W^T of
    the PyTorch Linear weights).  b2 is accepted for API parity but unused: a
    constant added to every logit cancels in the softmax.
    """
    del b2  # softmax-invariant
    B, S, F = encoder_output.shape
    F2 = 2 * F

    # Batch tile: a multiple of 8 (sublane alignment); pad B up to a multiple.
    # Kept modest so double-buffered inputs stay tiny vs. any chip's VMEM
    # (v7x 64 MiB / v6e 128 MiB / v5e 16 MiB scoped default).
    if tb is None:
        tb = min(((B + 7) // 8) * 8, 64)
    b_pad = pl.cdiv(B, tb) * tb
    if b_pad != B:
        pad = [(0, b_pad - B), (0, 0), (0, 0)]
        encoder_output = jnp.pad(encoder_output, pad)
        encoder_first_pose = jnp.pad(encoder_first_pose, pad)

    # Split W1 so the concatenation never materializes:
    #   [eo, fp] @ W1 == eo @ W1[:F] + fp @ W1[F:]
    w1a = w1[:F, :]
    w1b = w1[F:, :]
    w2_row = w2.reshape(1, F2)

    out = pl.pallas_call(
        attention_kernel,
        out_shape=jax.ShapeDtypeStruct((b_pad, F2), encoder_output.dtype),
        grid_spec=pltpu.PrefetchScalarGridSpec(
            num_scalar_prefetch=0,
            grid=(b_pad // tb,),
            in_specs=[
                pl.BlockSpec((tb, S, F), lambda i: (i, 0, 0)),   # encoder_output
                pl.BlockSpec((tb, S, F), lambda i: (i, 0, 0)),   # encoder_first_pose
                pl.BlockSpec((F, F2), lambda i: (0, 0)),         # W1 top half
                pl.BlockSpec((F, F2), lambda i: (0, 0)),         # W1 bottom half
                pl.BlockSpec((1, F2), lambda i: (0, 0)),         # b1
                pl.BlockSpec((1, F2), lambda i: (0, 0)),         # w2 as a row
            ],
            out_specs=pl.BlockSpec((tb, F2), lambda i: (i, 0)),
        ),
        compiler_params=pltpu.CompilerParams(
            dimension_semantics=("parallel",),   # v7x: both TCs split the batch tiles
        ),
    )(encoder_output, encoder_first_pose, w1a, w1b, b1, w2_row)
    return out[:B]


def attention_reference(encoder_output, encoder_first_pose, w1, b1, w2, b2):
    """Pure-JAX reference matching the PyTorch forward exactly (incl. b2)."""
    combined = jnp.concatenate([encoder_output, encoder_first_pose], axis=-1)
    h = jnp.tanh(combined @ w1 + b1[0])
    logits = h @ w2 + b2[0]
    weights = jax.nn.softmax(logits, axis=1)
    return jnp.sum(weights * combined, axis=1)


if __name__ == "__main__":
    B, S, F = 16, 8, 32
    F2 = 2 * F

    key = jax.random.PRNGKey(0)
    k_eo, k_fp, k_w1, k_b1, k_w2, k_b2 = jax.random.split(key, 6)

    encoder_output = jax.random.normal(k_eo, (B, S, F), dtype=jnp.float32)
    encoder_first_pose = jax.random.normal(k_fp, (B, S, F), dtype=jnp.float32)

    # PyTorch Linear default init: U(-1/sqrt(in), 1/sqrt(in)); weights stored
    # input-major (i.e. W^T of the PyTorch weight matrices).
    bound1 = 1.0 / jnp.sqrt(jnp.float32(F2))
    w1 = jax.random.uniform(k_w1, (F2, F2), jnp.float32, -bound1, bound1)
    b1 = jax.random.uniform(k_b1, (1, F2), jnp.float32, -bound1, bound1)
    w2 = jax.random.uniform(k_w2, (F2, 1), jnp.float32, -bound1, bound1)
    b2 = jax.random.uniform(k_b2, (1, 1), jnp.float32, -bound1, bound1)

    # tb=8 with B=16 exercises a 2-step grid in this small demo.
    out = attention_forward(encoder_output, encoder_first_pose, w1, b1, w2, b2, tb=8)
    jax.block_until_ready(out)

    ref = attention_reference(encoder_output, encoder_first_pose, w1, b1, w2, b2)
    assert out.shape == (B, F2), out.shape
    assert jnp.allclose(out, ref, atol=1e-5, rtol=1e-5), "mismatch vs JAX reference"

    print("KERNEL_OK")
</pallas_src>

<mosaic_0001>
module attributes {stable_mosaic.version = 11 : i64} {
  func.func @attention_kernel(%arg0: i32, %arg1: memref<8x8x32xf32, #tpu.memory_space<vmem>>, %arg2: memref<8x8x32xf32, #tpu.memory_space<vmem>>, %arg3: memref<32x64xf32, #tpu.memory_space<vmem>>, %arg4: memref<32x64xf32, #tpu.memory_space<vmem>>, %arg5: memref<1x64xf32, #tpu.memory_space<vmem>>, %arg6: memref<1x64xf32, #tpu.memory_space<vmem>>, %arg7: memref<8x64xf32, #tpu.memory_space<vmem>>) attributes {dimension_semantics = [#tpu.dimension_semantics<parallel>], iteration_bounds = array<i64: 2>, scalar_prefetch = 0 : i64, scratch_operands = 0 : i64, tpu.core_type = #tpu.core_type<tc>, window_params = [{transform_indices = @transform_0, window_bounds = array<i64: 8, 8, 32>}, {transform_indices = @transform_1, window_bounds = array<i64: 8, 8, 32>}, {pipeline_mode = #tpu.pipeline_mode<synchronous>, transform_indices = @transform_2, window_bounds = array<i64: 32, 64>}, {pipeline_mode = #tpu.pipeline_mode<synchronous>, transform_indices = @transform_3, window_bounds = array<i64: 32, 64>}, {pipeline_mode = #tpu.pipeline_mode<synchronous>, transform_indices = @transform_4, window_bounds = array<i64: 1, 64>}, {pipeline_mode = #tpu.pipeline_mode<synchronous>, transform_indices = @transform_5, window_bounds = array<i64: 1, 64>}, {transform_indices = @transform_6, window_bounds = array<i64: 8, 64>}]} {
    %c0 = arith.constant 0 : index
    %c0_0 = arith.constant 0 : index
    %c0_1 = arith.constant 0 : index
    %0 = vector.load %arg1[%c0, %c0_0, %c0_1] : memref<8x8x32xf32, #tpu.memory_space<vmem>>, vector<8x8x32xf32>
    %c0_2 = arith.constant 0 : index
    %c0_3 = arith.constant 0 : index
    %c0_4 = arith.constant 0 : index
    %1 = vector.load %arg2[%c0_2, %c0_3, %c0_4] : memref<8x8x32xf32, #tpu.memory_space<vmem>>, vector<8x8x32xf32>
    %c0_5 = arith.constant 0 : index
    %c0_6 = arith.constant 0 : index
    %2 = vector.load %arg3[%c0_5, %c0_6] : memref<32x64xf32, #tpu.memory_space<vmem>>, vector<32x64xf32>
    %c0_7 = arith.constant 0 : index
    %c0_8 = arith.constant 0 : index
    %3 = vector.load %arg4[%c0_7, %c0_8] : memref<32x64xf32, #tpu.memory_space<vmem>>, vector<32x64xf32>
    %c0_9 = arith.constant 0 : index
    %c0_10 = arith.constant 0 : index
    %4 = vector.load %arg5[%c0_9, %c0_10] : memref<1x64xf32, #tpu.memory_space<vmem>>, vector<1x64xf32>
    %c0_11 = arith.constant 0 : index
    %c0_12 = arith.constant 0 : index
    %5 = vector.load %arg6[%c0_11, %c0_12] : memref<1x64xf32, #tpu.memory_space<vmem>>, vector<1x64xf32>
    %6 = vector.shape_cast %0 : vector<8x8x32xf32> to vector<64x32xf32>
    %7 = vector.shape_cast %1 : vector<8x8x32xf32> to vector<64x32xf32>
    %cst = arith.constant dense<0.000000e+00> : vector<64x64xf32>
    %8 = tpu.matmul %6, %2, %cst {dimension_numbers = #tpu.dot_dimension_numbers<[1], [0], [0], [1], [0, 0, 1, 1], [], []>} : vector<64x32xf32>, vector<32x64xf32>, vector<64x64xf32> -> vector<64x64xf32>
    %cst_13 = arith.constant dense<0.000000e+00> : vector<64x64xf32>
    %9 = tpu.matmul %7, %3, %cst_13 {dimension_numbers = #tpu.dot_dimension_numbers<[1], [0], [0], [1], [0, 0, 1, 1], [], []>} : vector<64x32xf32>, vector<32x64xf32>, vector<64x64xf32> -> vector<64x64xf32>
    %10 = arith.addf %8, %9 : vector<64x64xf32>
    %11 = vector.broadcast %4 : vector<1x64xf32> to vector<64x64xf32>
    %12 = arith.addf %10, %11 : vector<64x64xf32>
    %13 = math.tanh %12 : vector<64x64xf32>
    %14 = vector.shape_cast %13 : vector<64x64xf32> to vector<8x8x64xf32>
    %15 = vector.shape_cast %5 : vector<1x64xf32> to vector<1x1x64xf32>
    %16 = vector.broadcast %15 : vector<1x1x64xf32> to vector<8x8x64xf32>
    %17 = arith.mulf %14, %16 : vector<8x8x64xf32>
    %cst_14 = arith.constant dense<0.000000e+00> : vector<8x8xf32>
    %18 = vector.multi_reduction <add>, %17, %cst_14 [2] : vector<8x8x64xf32> to vector<8x8xf32>
    %19 = vector.shape_cast %18 : vector<8x8xf32> to vector<8x8x1xf32>
    %cst_15 = arith.constant dense<0xFF800000> : vector<8x1xf32>
    %20 = vector.multi_reduction <maximumf>, %19, %cst_15 [1] : vector<8x8x1xf32> to vector<8x1xf32>
    %21 = vector.shape_cast %20 : vector<8x1xf32> to vector<8x1x1xf32>
    %22 = vector.broadcast %21 : vector<8x1x1xf32> to vector<8x8x1xf32>
    %23 = arith.subf %19, %22 : vector<8x8x1xf32>
    %24 = math.exp %23 : vector<8x8x1xf32>
    %cst_16 = arith.constant dense<0.000000e+00> : vector<8x1xf32>
    %25 = vector.multi_reduction <add>, %24, %cst_16 [1] : vector<8x8x1xf32> to vector<8x1xf32>
    %26 = vector.shape_cast %25 : vector<8x1xf32> to vector<8x1x1xf32>
    %27 = vector.broadcast %26 : vector<8x1x1xf32> to vector<8x8x1xf32>
    %28 = arith.divf %24, %27 : vector<8x8x1xf32>
    %29 = vector.broadcast %28 : vector<8x8x1xf32> to vector<8x8x32xf32>
    %30 = arith.mulf %29, %0 : vector<8x8x32xf32>
    %cst_17 = arith.constant dense<0.000000e+00> : vector<8x32xf32>
    %31 = vector.multi_reduction <add>, %30, %cst_17 [1] : vector<8x8x32xf32> to vector<8x32xf32>
    %c0_18 = arith.constant 0 : index
    %c0_19 = arith.constant 0 : index
    %32 = vector.load %arg7[%c0_18, %c0_19] : memref<8x64xf32, #tpu.memory_space<vmem>>, vector<8x32xf32>
    tpu.vector_store %arg7[%c0_18, %c0_19], %31 {strides = array<i32>} : memref<8x64xf32, #tpu.memory_space<vmem>>, vector<8x32xf32>,
    %33 = vector.broadcast %28 : vector<8x8x1xf32> to vector<8x8x32xf32>
    %34 = arith.mulf %33, %1 : vector<8x8x32xf32>
    %cst_20 = arith.constant dense<0.000000e+00> : vector<8x32xf32>
    %35 = vector.multi_reduction <add>, %34, %cst_20 [1] : vector<8x8x32xf32> to vector<8x32xf32>
    %c0_21 = arith.constant 0 : index
    %c32 = arith.constant 32 : index
    %36 = vector.load %arg7[%c0_21, %c32] : memref<8x64xf32, #tpu.memory_space<vmem>>, vector<8x32xf32>
    tpu.vector_store %arg7[%c0_21, %c32], %35 {strides = array<i32>} : memref<8x64xf32, #tpu.memory_space<vmem>>, vector<8x32xf32>,
    return
  }
  func.func @transform_0(%arg0: i32) -> (i32, i32, i32) {
    %c0_i32 = arith.constant 0 : i32
    %c0_i32_0 = arith.constant 0 : i32
    %c0_i32_1 = arith.constant 0 : i32
    return %arg0, %c0_i32, %c0_i32_0 : i32, i32, i32
  }
  func.func @transform_1(%arg0: i32) -> (i32, i32, i32) {
    %c0_i32 = arith.constant 0 : i32
    %c0_i32_0 = arith.constant 0 : i32
    %c0_i32_1 = arith.constant 0 : i32
    return %arg0, %c0_i32, %c0_i32_0 : i32, i32, i32
  }
  func.func @transform_2(%arg0: i32) -> (i32, i32) {
    %c0_i32 = arith.constant 0 : i32
    %c0_i32_0 = arith.constant 0 : i32
    %c0_i32_1 = arith.constant 0 : i32
    return %c0_i32, %c0_i32_0 : i32, i32
  }
  func.func @transform_3(%arg0: i32) -> (i32, i32) {
    %c0_i32 = arith.constant 0 : i32
    %c0_i32_0 = arith.constant 0 : i32
    %c0_i32_1 = arith.constant 0 : i32
    return %c0_i32, %c0_i32_0 : i32, i32
  }
  func.func @transform_4(%arg0: i32) -> (i32, i32) {
    %c0_i32 = arith.constant 0 : i32
    %c0_i32_0 = arith.constant 0 : i32
    %c0_i32_1 = arith.constant 0 : i32
    return %c0_i32, %c0_i32_0 : i32, i32
  }
  func.func @transform_5(%arg0: i32) -> (i32, i32) {
    %c0_i32 = arith.constant 0 : i32
    %c0_i32_0 = arith.constant 0 : i32
    %c0_i32_1 = arith.constant 0 : i32
    return %c0_i32, %c0_i32_0 : i32, i32
  }
  func.func @transform_6(%arg0: i32) -> (i32, i32) {
    %c0_i32 = arith.constant 0 : i32
    %c0_i32_0 = arith.constant 0 : i32
    return %arg0, %c0_i32 : i32, i32
  }
}

</mosaic_0001>

<llo_original>
// kernel: tpu_custom_call.1
$region0: #{tpu_custom_call.1}
  #allocation0 [shape = 'u32[]', space=smem, size = 0x4, offset = 0x4, fixed_abs, tag = 'smem constant byte address 0x4 - core index']
  #allocation1 [shape = 'u32[72,128]{1,0:T(1,128)}', space=vmem, size = 0x9000, scoped, tag = 'internal scratch']
  %s0 = inlined_call_operand.hbm [shape: f32[16,8,32], index: 0, kind: input, shape index: {}]
  %s1 = inlined_call_operand.hbm [shape: f32[16,8,32], index: 1, kind: input, shape index: {}]
  %s2 = inlined_call_operand.hbm [shape: f32[32,64], index: 2, kind: input, shape index: {}]
  %s3 = inlined_call_operand.hbm [shape: f32[32,64], index: 3, kind: input, shape index: {}]
  %s4 = inlined_call_operand.vmem [shape: f32[1,64], index: 4, kind: input, shape index: {}]
  %s5 = inlined_call_operand.vmem [shape: f32[1,64], index: 5, kind: input, shape index: {}]
  %s6 = inlined_call_operand.hbm [shape: f32[16,64], index: 6, kind: output, shape index: {}]
  %s7 = sld [smem:[#allocation0]]
  $region73: #{tpu_custom_call.1} parent=0
    _
  %s9 = ssub.s32 1, %s7
  %s10 = scalar_select 0, %s9, %s7
  $region1: #{tpu_custom_call.1} parent=0
    #allocation2 [shape = 'u8[65536]{0}', space=vmem, size = 0x10000, scoped, tag = 'input window, operand 0']
    #allocation3 [shape = 's32[2]{0}', space=sflag, size = 0x8, scoped, tag = 'scoped memory for tpu_custom_call.1']
    #allocation4 [shape = 's32[2]{0}', space=sflag, size = 0x8, scoped, tag = 'scoped memory for tpu_custom_call.1']
    #allocation5 [shape = 'u8[65536]{0}', space=vmem, size = 0x10000, scoped, tag = 'input window, operand 1']
    #allocation6 [shape = 's32[2]{0}', space=sflag, size = 0x8, scoped, tag = 'scoped memory for tpu_custom_call.1']
    #allocation7 [shape = 'u8[16384]{0}', space=vmem, size = 0x4000, scoped, tag = 'input window, operand 2, single buffered']
    #allocation8 [shape = 'u8[16384]{0}', space=vmem, size = 0x4000, scoped, tag = 'input window, operand 3, single buffered']
    #allocation9 [shape = 's32[1]{0}', space=sflag, size = 0x4, scoped, tag = 'scoped memory for tpu_custom_call.1']
    #allocation10 [shape = 'u8[8192]{0}', space=vmem, size = 0x2000, scoped, tag = 'output window, operand 0']
    %11 = vsyncpa [#allocation3], 0
    %s12 = scalar_lea.sflag [#allocation3], 1
    %13 = vsyncpa %s12, 0
    %14 = vsyncpa [#allocation6], 0
    %s15 = scalar_lea.sflag [#allocation6], 1
    %16 = vsyncpa %s15, 0
    %17 = vsyncpa [#allocation9], 0
    %18 = vsyncpa [#allocation4], 0
    %s19 = scalar_lea.sflag [#allocation4], 1
    %20 = vsyncpa %s19, 0
    loop: start=0, step=1, limit=4
    $region2: #{tpu_custom_call.1} parent=1 // loop_pre_header
      _
    $region3: #{tpu_custom_call.1} parent=1 // loop_header
      %s22 = sphi 0, %s26
      %p23 = scmp.ge.s32.totalorder %s22, 4
      %s32 = sphi 0, %s34
      %s35 = sphi 0, %s32
      %s36 = sphi 0, %s35
      %s52 = sphi 0, %s36
      %s58 = sphi 0, %s60
      %s61 = sphi 0, %s58
      %s62 = sphi 0, %s61
      %s78 = sphi 0, %s62
      %s82 = sphi 0, %s82
      %s84 = sphi 0, %s82
      %s85 = sphi 0, %s84
      %s99 = sphi 0, %s85
      %s103 = sphi 0, %s103
      %s105 = sphi 0, %s103
      %s106 = sphi 0, %s105
      %s120 = sphi 0, %s106
      %s124 = sphi 0, %s124
      %s126 = sphi 0, %s124
      %s127 = sphi 0, %s126
      %s141 = sphi 0, %s127
      %s145 = sphi 0, %s145
      %s147 = sphi 0, %s145
      %s148 = sphi 0, %s147
      %s162 = sphi 0, %s148
      %s168 = sphi 0, %s170
      %s171 = sphi 0, %s168
      %s172 = sphi 0, %s171
      %s188 = sphi 0, %s172
    $region4: #{tpu_custom_call.1} parent=1 // loop_header_branch
      %25 = sbr.rel (%p23) target = $region8
    $region5: #{tpu_custom_call.1} parent=1 // loop_body
      %s27 = ssub.s32 %s22, 1
      %s28 = ssub.s32 %s22, 2
      %s29 = sadd.s32 %s22, 1
      %s30 = ssub.s32 %s22, %s29
      %p31 = scmp.eq.s32.totalorder %s30, 0
      %s33 = sadd.s32 %s32, 1
      %s34 = scalar_select %p31, %s32, %s33
      %p37 = pneg %p31
      %p38 = scmp.eq.s32.totalorder %s22, 1
      %p39 = por %p37, %p38
      %p40 = scmp.ne.s32.totalorder %s32, %s35
      %p41 = scmp.eq.s32.totalorder %s22, 0
      %p42 = por %p40, %p41
      %p43 = scmp.ne.s32.totalorder %s32, %s35
      %p44 = scmp.eq.s32.totalorder %s27, 1
      %p45 = por %p43, %p44
      %p46 = scmp.ne.s32.totalorder %s35, %s36
      %p47 = scmp.eq.s32.totalorder %s27, 0
      %p48 = por %p46, %p47
      %p49 = scmp.ne.s32.totalorder %s35, %s36
      %p50 = scmp.eq.s32.totalorder %s28, 1
      %p51 = por %p49, %p50
      %p53 = scmp.ne.s32.totalorder %s36, %s52
      %p54 = scmp.eq.s32.totalorder %s28, 0
      %p55 = por %p53, %p54
      %s56 = ssub.s32 %s22, %s29
      %p57 = scmp.eq.s32.totalorder %s56, 0
      %s59 = sadd.s32 %s58, 1
      %s60 = scalar_select %p57, %s58, %s59
      %p63 = pneg %p57
      %p64 = scmp.eq.s32.totalorder %s22, 1
      %p65 = por %p63, %p64
      %p66 = scmp.ne.s32.totalorder %s58, %s61
      %p67 = scmp.eq.s32.totalorder %s22, 0
      %p68 = por %p66, %p67
      %p69 = scmp.ne.s32.totalorder %s58, %s61
      %p70 = scmp.eq.s32.totalorder %s27, 1
      %p71 = por %p69, %p70
      %p72 = scmp.ne.s32.totalorder %s61, %s62
      %p73 = scmp.eq.s32.totalorder %s27, 0
      %p74 = por %p72, %p73
      %p75 = scmp.ne.s32.totalorder %s61, %s62
      %p76 = scmp.eq.s32.totalorder %s28, 1
      %p77 = por %p75, %p76
      %p79 = scmp.ne.s32.totalorder %s62, %s78
      %p80 = scmp.eq.s32.totalorder %s28, 0
      %p81 = por %p79, %p80
      %s83 = sadd.s32 %s82, 1
      %p86 = scmp.eq.s32.totalorder %s22, 1
      %p87 = scmp.ne.s32.totalorder %s82, %s84
      %p88 = scmp.eq.s32.totalorder %s22, 0
      %p89 = por %p87, %p88
      %p90 = scmp.ne.s32.totalorder %s82, %s84
      %p91 = scmp.eq.s32.totalorder %s27, 1
      %p92 = por %p90, %p91
      %p93 = scmp.ne.s32.totalorder %s84, %s85
      %p94 = scmp.eq.s32.totalorder %s27, 0
      %p95 = por %p93, %p94
      %p96 = scmp.ne.s32.totalorder %s84, %s85
      %p97 = scmp.eq.s32.totalorder %s28, 1
      %p98 = por %p96, %p97
      %p100 = scmp.ne.s32.totalorder %s85, %s99
      %p101 = scmp.eq.s32.totalorder %s28, 0
      %p102 = por %p100, %p101
      %s104 = sadd.s32 %s103, 1
      %p107 = scmp.eq.s32.totalorder %s22, 1
      %p108 = scmp.ne.s32.totalorder %s103, %s105
      %p109 = scmp.eq.s32.totalorder %s22, 0
      %p110 = por %p108, %p109
      %p111 = scmp.ne.s32.totalorder %s103, %s105
      %p112 = scmp.eq.s32.totalorder %s27, 1
      %p113 = por %p111, %p112
      %p114 = scmp.ne.s32.totalorder %s105, %s106
      %p115 = scmp.eq.s32.totalorder %s27, 0
      %p116 = por %p114, %p115
      %p117 = scmp.ne.s32.totalorder %s105, %s106
      %p118 = scmp.eq.s32.totalorder %s28, 1
      %p119 = por %p117, %p118
      %p121 = scmp.ne.s32.totalorder %s106, %s120
      %p122 = scmp.eq.s32.totalorder %s28, 0
      %p123 = por %p121, %p122
      %s125 = sadd.s32 %s124, 1
      %p128 = scmp.eq.s32.totalorder %s22, 1
      %p129 = scmp.ne.s32.totalorder %s124, %s126
      %p130 = scmp.eq.s32.totalorder %s22, 0
      %p131 = por %p129, %p130
      %p132 = scmp.ne.s32.totalorder %s124, %s126
      %p133 = scmp.eq.s32.totalorder %s27, 1
      %p134 = por %p132, %p133
      %p135 = scmp.ne.s32.totalorder %s126, %s127
      %p136 = scmp.eq.s32.totalorder %s27, 0
      %p137 = por %p135, %p136
      %p138 = scmp.ne.s32.totalorder %s126, %s127
      %p139 = scmp.eq.s32.totalorder %s28, 1
      %p140 = por %p138, %p139
      %p142 = scmp.ne.s32.totalorder %s127, %s141
      %p143 = scmp.eq.s32.totalorder %s28, 0
      %p144 = por %p142, %p143
      %s146 = sadd.s32 %s145, 1
      %p149 = scmp.eq.s32.totalorder %s22, 1
      %p150 = scmp.ne.s32.totalorder %s145, %s147
      %p151 = scmp.eq.s32.totalorder %s22, 0
      %p152 = por %p150, %p151
      %p153 = scmp.ne.s32.totalorder %s145, %s147
      %p154 = scmp.eq.s32.totalorder %s27, 1
      %p155 = por %p153, %p154
      %p156 = scmp.ne.s32.totalorder %s147, %s148
      %p157 = scmp.eq.s32.totalorder %s27, 0
      %p158 = por %p156, %p157
      %p159 = scmp.ne.s32.totalorder %s147, %s148
      %p160 = scmp.eq.s32.totalorder %s28, 1
      %p161 = por %p159, %p160
      %p163 = scmp.ne.s32.totalorder %s148, %s162
      %p164 = scmp.eq.s32.totalorder %s28, 0
      %p165 = por %p163, %p164
      %s166 = ssub.s32 %s22, %s29
      %p167 = scmp.eq.s32.totalorder %s166, 0
      %s169 = sadd.s32 %s168, 1
      %s170 = scalar_select %p167, %s168, %s169
      %p173 = pneg %p167
      %p174 = scmp.eq.s32.totalorder %s22, 1
      %p175 = por %p173, %p174
      %p176 = scmp.ne.s32.totalorder %s168, %s171
      %p177 = scmp.eq.s32.totalorder %s22, 0
      %p178 = por %p176, %p177
      %p179 = scmp.ne.s32.totalorder %s168, %s171
      %p180 = scmp.eq.s32.totalorder %s27, 1
      %p181 = por %p179, %p180
      %p182 = scmp.ne.s32.totalorder %s171, %s172
      %p183 = scmp.eq.s32.totalorder %s27, 0
      %p184 = por %p182, %p183
      %p185 = scmp.ne.s32.totalorder %s171, %s172
      %p186 = scmp.eq.s32.totalorder %s28, 1
      %p187 = por %p185, %p186
      %p189 = scmp.ne.s32.totalorder %s172, %s188
      %p190 = scmp.eq.s32.totalorder %s28, 0
      %p191 = por %p189, %p190
      %p192 = scmp.le.s32.totalorder 1, %s22
      %p193 = scmp.lt.s32.totalorder %s22, 3
      %p194 = pnand %p192, %p193
      %p195 = pneg %p194
      // Predicated region
      $region9: #{tpu_custom_call.1} parent=5 // pred_check
        _
      $region10: #{tpu_custom_call.1} parent=5 // pred_check_branch
        %197 = sbr.rel (%p194) target = $region12
      $region11: #{tpu_custom_call.1} parent=5 // pred_region
        %s198 = ssub.s32 %s22, 1
        // Predicated region
        $region13: #{tpu_custom_call.1} parent=11 // pred_check
          %p199 = pneg %p95
        $region14: #{tpu_custom_call.1} parent=11 // pred_check_branch
          %201 = sbr.rel (%p199) target = $region16
        $region15: #{tpu_custom_call.1} parent=11 // pred_region
          %203 = vsyncadd [#allocation6], 0
          %s204 = sshll.u32 %s2, 4
          %s205 = int_to_ptr.hbm [resolvable:$true] %s204
          %s206 = sshll.u32 [#allocation7], 4
          %s207 = int_to_ptr.vmem [resolvable:$true] %s206
          %212 = dma.hbm_to_vmem [thread:$0]  %s205, 512, %s207, [#allocation6], 128, 128, 8
        $region16: #{tpu_custom_call.1} parent=11 // pred_fallthru
          _
        // Predicated region
        $region17: #{tpu_custom_call.1} parent=11 // pred_check
          %p213 = pneg %p116
        $region18: #{tpu_custom_call.1} parent=11 // pred_check_branch
          %215 = sbr.rel (%p213) target = $region20
        $region19: #{tpu_custom_call.1} parent=11 // pred_region
          %217 = vsyncadd [#allocation9], 0
          %s218 = sshll.u32 %s3, 4
          %s219 = int_to_ptr.hbm [resolvable:$true] %s218
          %s220 = sshll.u32 [#allocation8], 4
          %s221 = int_to_ptr.vmem [resolvable:$true] %s220
          %226 = dma.hbm_to_vmem [thread:$0]  %s219, 512, %s221, [#allocation9], 128, 128, 8
        $region20: #{tpu_custom_call.1} parent=11 // pred_fallthru
          _
        // Predicated region
        $region21: #{tpu_custom_call.1} parent=11 // pred_check
          %p227 = pneg %p137
        $region22: #{tpu_custom_call.1} parent=11 // pred_check_branch
          %229 = sbr.rel (%p227) target = $region24
        $region23: #{tpu_custom_call.1} parent=11 // pred_region
          _
        $region24: #{tpu_custom_call.1} parent=11 // pred_fallthru
          _
        // Predicated region
        $region25: #{tpu_custom_call.1} parent=11 // pred_check
          %p230 = pneg %p158
        $region26: #{tpu_custom_call.1} parent=11 // pred_check_branch
          %232 = sbr.rel (%p230) target = $region28
        $region27: #{tpu_custom_call.1} parent=11 // pred_region
          _
        $region28: #{tpu_custom_call.1} parent=11 // pred_fallthru
          _
      $region12: #{tpu_custom_call.1} parent=5 // pred_fallthru
        _
      %p233 = scmp.lt.s32.totalorder %s22, 2
      // Predicated region
      $region29: #{tpu_custom_call.1} parent=5 // pred_check
        %p234 = pneg %p233
      $region30: #{tpu_custom_call.1} parent=5 // pred_check_branch
        %236 = sbr.rel (%p234) target = $region32
      $region31: #{tpu_custom_call.1} parent=5 // pred_region
        // Predicated region
        $region33: #{tpu_custom_call.1} parent=31 // pred_check
          %p237 = pneg %p42
        $region34: #{tpu_custom_call.1} parent=31 // pred_check_branch
          %239 = sbr.rel (%p237) target = $region36
        $region35: #{tpu_custom_call.1} parent=31 // pred_region
          %s240 = sand.u32 %s32, 1
          %s241 = scalar_lea.sflag [#allocation3], %s240
          %s242 = sand.u32 %s32, 1
          %s243 = smul.addr %s242, 64
          %s244 = scalar_lea.vmem [#allocation2], %s243
          %s245 = smul.u32 8, %s22
          %247 = vsyncadd %s241, 0
          %s248 = smul.addr %s245, 8
          %s249 = scalar_lea.hbm %s0, %s248
          %s250 = sshll.u32 %s249, 4
          %s251 = int_to_ptr.hbm [resolvable:$true] %s250
          %s252 = sshll.u32 %s244, 4
          %s253 = int_to_ptr.vmem [resolvable:$true] %s252
          %258 = dma.hbm_to_vmem [thread:$0]  %s251, 1024, %s253, %s241, 128, 128, 8
        $region36: #{tpu_custom_call.1} parent=31 // pred_fallthru
          _
        // Predicated region
        $region37: #{tpu_custom_call.1} parent=31 // pred_check
          %p259 = pneg %p68
        $region38: #{tpu_custom_call.1} parent=31 // pred_check_branch
          %261 = sbr.rel (%p259) target = $region40
        $region39: #{tpu_custom_call.1} parent=31 // pred_region
          %s262 = sand.u32 %s22, 1
          %s263 = scalar_lea.sflag [#allocation6], %s262
          %s264 = sand.u32 %s58, 1
          %s265 = smul.addr %s264, 64
          %s266 = scalar_lea.vmem [#allocation5], %s265
          %s267 = smul.u32 8, %s22
          %269 = vsyncadd %s263, 0
          %s270 = smul.addr %s267, 8
          %s271 = scalar_lea.hbm %s1, %s270
          %s272 = sshll.u32 %s271, 4
          %s273 = int_to_ptr.hbm [resolvable:$true] %s272
          %s274 = sshll.u32 %s266, 4
          %s275 = int_to_ptr.vmem [resolvable:$true] %s274
          %280 = dma.hbm_to_vmem [thread:$0]  %s273, 1024, %s275, %s263, 128, 128, 8
        $region40: #{tpu_custom_call.1} parent=31 // pred_fallthru
          _
      $region32: #{tpu_custom_call.1} parent=5 // pred_fallthru
        _
      %p281 = scmp.le.s32.totalorder 1, %s22
      %p282 = scmp.lt.s32.totalorder %s22, 3
      %p283 = pnand %p281, %p282
      %p284 = pneg %p283
      // Predicated region
      $region41: #{tpu_custom_call.1} parent=5 // pred_check
        _
      $region42: #{tpu_custom_call.1} parent=5 // pred_check_branch
        %286 = sbr.rel (%p283) target = $region44
      $region43: #{tpu_custom_call.1} parent=5 // pred_region
        %s287 = ssub.s32 %s22, 1
        %s288 = sand.u32 %s35, 1
        %s289 = scalar_lea.sflag [#allocation3], %s288
        %s290 = sand.u32 %s35, 1
        %s291 = smul.addr %s290, 64
        %s292 = scalar_lea.vmem [#allocation2], %s291
        // Predicated region
        $region45: #{tpu_custom_call.1} parent=43 // pred_check
          %p293 = pneg %p48
        $region46: #{tpu_custom_call.1} parent=43 // pred_check_branch
          %295 = sbr.rel (%p293) target = $region48
        $region47: #{tpu_custom_call.1} parent=43 // pred_region
          %297 = dma.done %s289, 1024
        $region48: #{tpu_custom_call.1} parent=43 // pred_fallthru
          _
        %s298 = sand.u32 %s27, 1
        %s299 = scalar_lea.sflag [#allocation6], %s298
        %s300 = sand.u32 %s61, 1
        %s301 = smul.addr %s300, 64
        %s302 = scalar_lea.vmem [#allocation5], %s301
        // Predicated region
        $region49: #{tpu_custom_call.1} parent=43 // pred_check
          %p303 = pneg %p74
        $region50: #{tpu_custom_call.1} parent=43 // pred_check_branch
          %305 = sbr.rel (%p303) target = $region52
        $region51: #{tpu_custom_call.1} parent=43 // pred_region
          %307 = dma.done %s299, 1024
        $region52: #{tpu_custom_call.1} parent=43 // pred_fallthru
          _
        // Predicated region
        $region53: #{tpu_custom_call.1} parent=43 // pred_check
          %p308 = pneg %p95
        $region54: #{tpu_custom_call.1} parent=43 // pred_check_branch
          %310 = sbr.rel (%p308) target = $region56
        $region55: #{tpu_custom_call.1} parent=43 // pred_region
          %312 = dma.done [#allocation6], 512
        $region56: #{tpu_custom_call.1} parent=43 // pred_fallthru
          _
        // Predicated region
        $region57: #{tpu_custom_call.1} parent=43 // pred_check
          %p313 = pneg %p116
        $region58: #{tpu_custom_call.1} parent=43 // pred_check_branch
          %315 = sbr.rel (%p313) target = $region60
        $region59: #{tpu_custom_call.1} parent=43 // pred_region
          %317 = dma.done [#allocation9], 512
        $region60: #{tpu_custom_call.1} parent=43 // pred_fallthru
          _
        %s318 = sand.u32 %s35, 1
        %s319 = scalar_lea.sflag [#allocation3], %s318
        %s320 = sand.u32 %s35, 1
        %s321 = smul.addr %s320, 64
        %s322 = scalar_lea.vmem [#allocation2], %s321
        %p323 = pneg %p48
        %p324 = pneg %p45
        %s325 = sand.u32 %s27, 1
        %s326 = scalar_lea.sflag [#allocation6], %s325
        %s327 = sand.u32 %s61, 1
        %s328 = smul.addr %s327, 64
        %s329 = scalar_lea.vmem [#allocation5], %s328
        %p330 = pneg %p74
        %p331 = pneg %p71
        %p332 = pneg %p95
        %p333 = pneg %p92
        %p334 = pneg %p116
        %p335 = pneg %p113
        %p336 = pneg %p137
        %p337 = pneg %p134
        %p338 = pneg %p158
        %p339 = pneg %p155
        %p340 = pneg %p184
        %p341 = pneg %p181
        %s342 = sand.u32 %s171, 1
        %s343 = scalar_lea.sflag [#allocation4], %s342
        %s344 = sand.u32 %s171, 1
        %s345 = smul.addr %s344, 8
        %s346 = scalar_lea.vmem [#allocation10], %s345
        %s347 = smul.u32 8, %s27
        %s348 = smul.u32 8, %s27
        %v349 = vld [vmem:[%s292] sm:$0xff]
        %v350 = vld [vmem:[%s292 + $0x8] sm:$0xff]
        %v351 = vld [vmem:[%s292 + $0x10] sm:$0xff]
        %v352 = vld [vmem:[%s292 + $0x18] sm:$0xff]
        %v353 = vld [vmem:[%s292 + $0x20] sm:$0xff]
        %v354 = vld [vmem:[%s292 + $0x28] sm:$0xff]
        %v355 = vld [vmem:[%s292 + $0x30] sm:$0xff]
        %v356 = vld [vmem:[%s292 + $0x38] sm:$0xff]
        %v357 = vld [vmem:[%s302] sm:$0xff]
        %v358 = vld [vmem:[%s302 + $0x8] sm:$0xff]
        %v359 = vld [vmem:[%s302 + $0x10] sm:$0xff]
        %v360 = vld [vmem:[%s302 + $0x18] sm:$0xff]
        %v361 = vld [vmem:[%s302 + $0x20] sm:$0xff]
        %v362 = vld [vmem:[%s302 + $0x28] sm:$0xff]
        %v363 = vld [vmem:[%s302 + $0x30] sm:$0xff]
        %v364 = vld [vmem:[%s302 + $0x38] sm:$0xff]
        %v365 = vld [vmem:[#allocation7] sm:$0xff]
        %v366 = vld [vmem:[#allocation7 + $0x8] sm:$0xff]
        %v367 = vld [vmem:[#allocation7 + $0x10] sm:$0xff]
        %v368 = vld [vmem:[#allocation7 + $0x18] sm:$0xff]
        %v369 = vld [vmem:[#allocation8] sm:$0xff]
        %v370 = vld [vmem:[#allocation8 + $0x8] sm:$0xff]
        %v371 = vld [vmem:[#allocation8 + $0x10] sm:$0xff]
        %v372 = vld [vmem:[#allocation8 + $0x18] sm:$0xff]
        %v373 = vld [vmem:[%s4] sm:$0x1]
        %v374 = vld [vmem:[%s5] sm:$0x1]
        %vm375 = vcmask 261120
        %v377 = vsel %vm375, %v357, 0
        %v380 = vsel %vm375, %v358, 0
        %v383 = vsel %vm375, %v359, 0
        %v386 = vsel %vm375, %v360, 0
        %v389 = vsel %vm375, %v361, 0
        %v392 = vsel %vm375, %v362, 0
        %v395 = vsel %vm375, %v363, 0
        %v398 = vsel %vm375, %v364, 0
        %400 = vmatpush.msra.mxu0 0.0
        %401 = vmatpush.msra.mxu0 0.0
        %402 = vmatpush.msra.mxu0 0.0
        %403 = vmatpush.msra.mxu0 0.0
        %404 = vmatpush.msra.mxu0 0.0
        %405 = vmatpush.msra.mxu0 0.0
        %406 = vmatpush.msra.mxu0 0.0
        %407 = vmatpush.msra.mxu0 0.0
        %408 = vmatpush.msra.mxu0 0.0
        %409 = vmatpush.msra.mxu0 0.0
        %410 = vmatpush.msra.mxu0 0.0
        %411 = vmatpush.msra.mxu0 0.0
        %412 = vmatpush.msra.mxu0 %v372
        %413 = vmatpush.msra.mxu0 %v371
        %414 = vmatpush.msra.mxu0 %v370
        %415 = vmatpush.msra.mxu0 %v369
        %416 = vmatmul.f32.gmra.mxu0 %v377
        %v417 = vpop.f32.mrf.mxu0
        %v418 = vadd.f32 0.0, %v417
        %419 = vmatmul.f32.gmra.mxu0 %v380
        %v420 = vpop.f32.mrf.mxu0
        %v421 = vadd.f32 0.0, %v420
        %422 = vmatmul.f32.gmra.mxu0 %v383
        %v423 = vpop.f32.mrf.mxu0
        %v424 = vadd.f32 0.0, %v423
        %425 = vmatmul.f32.gmra.mxu0 %v386
        %v426 = vpop.f32.mrf.mxu0
        %v427 = vadd.f32 0.0, %v426
        %428 = vmatmul.f32.gmra.mxu0 %v389
        %v429 = vpop.f32.mrf.mxu0
        %v430 = vadd.f32 0.0, %v429
        %431 = vmatmul.f32.gmra.mxu0 %v392
        %v432 = vpop.f32.mrf.mxu0
        %v433 = vadd.f32 0.0, %v432
        %434 = vmatmul.f32.gmra.mxu0 %v395
        %v435 = vpop.f32.mrf.mxu0
        %v436 = vadd.f32 0.0, %v435
        %437 = vmatmul.f32.gmra.mxu0 %v398
        %v438 = vpop.f32.mrf.mxu0
        %v439 = vadd.f32 0.0, %v438
        %440 = vdwg.mxu0
        %v442 = vsel %vm375, %v349, 0
        %v445 = vsel %vm375, %v350, 0
        %v448 = vsel %vm375, %v351, 0
        %v451 = vsel %vm375, %v352, 0
        %v454 = vsel %vm375, %v353, 0
        %v457 = vsel %vm375, %v354, 0
        %v460 = vsel %vm375, %v355, 0
        %v463 = vsel %vm375, %v356, 0
        %465 = vmatpush.msra.mxu0 0.0
        %466 = vmatpush.msra.mxu0 0.0
        %467 = vmatpush.msra.mxu0 0.0
        %468 = vmatpush.msra.mxu0 0.0
        %469 = vmatpush.msra.mxu0 0.0
        %470 = vmatpush.msra.mxu0 0.0
        %471 = vmatpush.msra.mxu0 0.0
        %472 = vmatpush.msra.mxu0 0.0
        %473 = vmatpush.msra.mxu0 0.0
        %474 = vmatpush.msra.mxu0 0.0
        %475 = vmatpush.msra.mxu0 0.0
        %476 = vmatpush.msra.mxu0 0.0
        %477 = vmatpush.msra.mxu0 %v368
        %478 = vmatpush.msra.mxu0 %v367
        %479 = vmatpush.msra.mxu0 %v366
        %480 = vmatpush.msra.mxu0 %v365
        %481 = vmatmul.f32.gmra.mxu0 %v442
        %v482 = vpop.f32.mrf.mxu0
        %v483 = vadd.f32 %v418, %v482
        %484 = vmatmul.f32.gmra.mxu0 %v445
        %v485 = vpop.f32.mrf.mxu0
        %v486 = vadd.f32 %v421, %v485
        %487 = vmatmul.f32.gmra.mxu0 %v448
        %v488 = vpop.f32.mrf.mxu0
        %v489 = vadd.f32 %v424, %v488
        %490 = vmatmul.f32.gmra.mxu0 %v451
        %v491 = vpop.f32.mrf.mxu0
        %v492 = vadd.f32 %v427, %v491
        %493 = vmatmul.f32.gmra.mxu0 %v454
        %v494 = vpop.f32.mrf.mxu0
        %v495 = vadd.f32 %v430, %v494
        %496 = vmatmul.f32.gmra.mxu0 %v457
        %v497 = vpop.f32.mrf.mxu0
        %v498 = vadd.f32 %v433, %v497
        %499 = vmatmul.f32.gmra.mxu0 %v460
        %v500 = vpop.f32.mrf.mxu0
        %v501 = vadd.f32 %v436, %v500
        %502 = vmatmul.f32.gmra.mxu0 %v463
        %v503 = vpop.f32.mrf.mxu0
        %v504 = vadd.f32 %v439, %v503
        %505 = vdwg.mxu0
        %v507 = vperm.slane %v373, 0
        %v509 = vadd.f32 %v483, %v507
        %v510 = vadd.f32 %v486, %v507
        %v511 = vadd.f32 %v489, %v507
        %v512 = vadd.f32 %v492, %v507
        %v513 = vadd.f32 %v495, %v507
        %v514 = vadd.f32 %v498, %v507
        %v515 = vadd.f32 %v501, %v507
        %v516 = vadd.f32 %v504, %v507
        %v517 = vtanh.pop %v509
        %v518 = vtanh.pop %v510
        %v519 = vtanh.pop %v511
        %v520 = vtanh.pop %v512
        %v521 = vtanh.pop %v513
        %v522 = vtanh.pop %v514
        %v523 = vtanh.pop %v515
        %v524 = vtanh.pop %v516
        %v526 = vperm.slane %v374, 0
        %v528 = vmul.f32 %v517, %v526
        %v529 = vmul.f32 %v518, %v526
        %v530 = vmul.f32 %v519, %v526
        %v531 = vmul.f32 %v520, %v526
        %v532 = vmul.f32 %v521, %v526
        %v533 = vmul.f32 %v522, %v526
        %v534 = vmul.f32 %v523, %v526
        %v535 = vmul.f32 %v524, %v526
        %vm536 = vcmask 523264
        %v537 = vsel %vm536, %v528, 0.0
        %538 = vadd.xlane.f32.xlu0 %v537
        %v539 = vpop.xlane.xlu0 %538
        %v540 = vsel %vm536, %v529, 0.0
        %541 = vadd.xlane.f32.xlu0 %v540
        %v542 = vpop.xlane.xlu0 %541
        %v543 = vsel %vm536, %v530, 0.0
        %544 = vadd.xlane.f32.xlu0 %v543
        %v545 = vpop.xlane.xlu0 %544
        %v546 = vsel %vm536, %v531, 0.0
        %547 = vadd.xlane.f32.xlu0 %v546
        %v548 = vpop.xlane.xlu0 %547
        %v549 = vsel %vm536, %v532, 0.0
        %550 = vadd.xlane.f32.xlu0 %v549
        %v551 = vpop.xlane.xlu0 %550
        %v552 = vsel %vm536, %v533, 0.0
        %553 = vadd.xlane.f32.xlu0 %v552
        %v554 = vpop.xlane.xlu0 %553
        %v555 = vsel %vm536, %v534, 0.0
        %556 = vadd.xlane.f32.xlu0 %v555
        %v557 = vpop.xlane.xlu0 %556
        %v558 = vsel %vm536, %v535, 0.0
        %559 = vadd.xlane.f32.xlu0 %v558
        %v560 = vpop.xlane.xlu0 %559
        %v561 = vrot.slane %v539, 4
        %v562 = vmax.f32 %v539, %v561
        %v563 = vrot.slane %v562, 2
        %v564 = vmax.f32 %v562, %v563
        %v565 = vrot.slane %v564, 1
        %v566 = vmax.f32 %v564, %v565
        %v567 = vrot.slane %v542, 4
        %v568 = vmax.f32 %v542, %v567
        %v569 = vrot.slane %v568, 2
        %v570 = vmax.f32 %v568, %v569
        %v571 = vrot.slane %v570, 1
        %v572 = vmax.f32 %v570, %v571
        %v573 = vrot.slane %v545, 4
        %v574 = vmax.f32 %v545, %v573
        %v575 = vrot.slane %v574, 2
        %v576 = vmax.f32 %v574, %v575
        %v577 = vrot.slane %v576, 1
        %v578 = vmax.f32 %v576, %v577
        %v579 = vrot.slane %v548, 4
        %v580 = vmax.f32 %v548, %v579
        %v581 = vrot.slane %v580, 2
        %v582 = vmax.f32 %v580, %v581
        %v583 = vrot.slane %v582, 1
        %v584 = vmax.f32 %v582, %v583
        %v585 = vrot.slane %v551, 4
        %v586 = vmax.f32 %v551, %v585
        %v587 = vrot.slane %v586, 2
        %v588 = vmax.f32 %v586, %v587
        %v589 = vrot.slane %v588, 1
        %v590 = vmax.f32 %v588, %v589
        %v591 = vrot.slane %v554, 4
        %v592 = vmax.f32 %v554, %v591
        %v593 = vrot.slane %v592, 2
        %v594 = vmax.f32 %v592, %v593
        %v595 = vrot.slane %v594, 1
        %v596 = vmax.f32 %v594, %v595
        %v597 = vrot.slane %v557, 4
        %v598 = vmax.f32 %v557, %v597
        %v599 = vrot.slane %v598, 2
        %v600 = vmax.f32 %v598, %v599
        %v601 = vrot.slane %v600, 1
        %v602 = vmax.f32 %v600, %v601
        %v603 = vrot.slane %v560, 4
        %v604 = vmax.f32 %v560, %v603
        %v605 = vrot.slane %v604, 2
        %v606 = vmax.f32 %v604, %v605
        %v607 = vrot.slane %v606, 1
        %v608 = vmax.f32 %v606, %v607
        %v609 = vsub.f32 %v539, %v566
        %v610 = vsub.f32 %v542, %v572
        %v611 = vsub.f32 %v545, %v578
        %v612 = vsub.f32 %v548, %v584
        %v613 = vsub.f32 %v551, %v590
        %v614 = vsub.f32 %v554, %v596
        %v615 = vsub.f32 %v557, %v602
        %v616 = vsub.f32 %v560, %v608
        %v617 = vmul.f32 %v609, 1.442695
        %v618 = vpow.pop %v617
        %v619 = vmul.f32 %v610, 1.442695
        %v620 = vpow.pop %v619
        %v621 = vmul.f32 %v611, 1.442695
        %v622 = vpow.pop %v621
        %v623 = vmul.f32 %v612, 1.442695
        %v624 = vpow.pop %v623
        %v625 = vmul.f32 %v613, 1.442695
        %v626 = vpow.pop %v625
        %v627 = vmul.f32 %v614, 1.442695
        %v628 = vpow.pop %v627
        %v629 = vmul.f32 %v615, 1.442695
        %v630 = vpow.pop %v629
        %v631 = vmul.f32 %v616, 1.442695
        %v632 = vpow.pop %v631
        %v633 = vrot.slane %v618, 4
        %v634 = vadd.f32 %v618, %v633
        %v635 = vrot.slane %v634, 2
        %v636 = vadd.f32 %v634, %v635
        %v637 = vrot.slane %v636, 1
        %v638 = vadd.f32 %v636, %v637
        %v639 = vrot.slane %v620, 4
        %v640 = vadd.f32 %v620, %v639
        %v641 = vrot.slane %v640, 2
        %v642 = vadd.f32 %v640, %v641
        %v643 = vrot.slane %v642, 1
        %v644 = vadd.f32 %v642, %v643
        %v645 = vrot.slane %v622, 4
        %v646 = vadd.f32 %v622, %v645
        %v647 = vrot.slane %v646, 2
        %v648 = vadd.f32 %v646, %v647
        %v649 = vrot.slane %v648, 1
        %v650 = vadd.f32 %v648, %v649
        %v651 = vrot.slane %v624, 4
        %v652 = vadd.f32 %v624, %v651
        %v653 = vrot.slane %v652, 2
        %v654 = vadd.f32 %v652, %v653
        %v655 = vrot.slane %v654, 1
        %v656 = vadd.f32 %v654, %v655
        %v657 = vrot.slane %v626, 4
        %v658 = vadd.f32 %v626, %v657
        %v659 = vrot.slane %v658, 2
        %v660 = vadd.f32 %v658, %v659
        %v661 = vrot.slane %v660, 1
        %v662 = vadd.f32 %v660, %v661
        %v663 = vrot.slane %v628, 4
        %v664 = vadd.f32 %v628, %v663
        %v665 = vrot.slane %v664, 2
        %v666 = vadd.f32 %v664, %v665
        %v667 = vrot.slane %v666, 1
        %v668 = vadd.f32 %v666, %v667
        %v669 = vrot.slane %v630, 4
        %v670 = vadd.f32 %v630, %v669
        %v671 = vrot.slane %v670, 2
        %v672 = vadd.f32 %v670, %v671
        %v673 = vrot.slane %v672, 1
        %v674 = vadd.f32 %v672, %v673
        %v675 = vrot.slane %v632, 4
        %v676 = vadd.f32 %v632, %v675
        %v677 = vrot.slane %v676, 2
        %v678 = vadd.f32 %v676, %v677
        %v679 = vrot.slane %v678, 1
        %v680 = vadd.f32 %v678, %v679
        %v681 = vrcp.pop %v638
        %v682 = vmul.f32 %v638, %v681
        %v683 = vsub.f32 1.0, %v682
        %v684 = vmul.f32 %v681, %v683
        %v685 = vadd.f32 %v681, %v684
        %vm686 = vweird.f32 %v638
        %vm687 = vweird.f32 %v681
        %vm688 = vmor %vm686, %vm687
        %v689 = vsel %vm688, %v681, %v685
        %v690 = vand.u32 2147483647, %v638
        %vm691 = vcmp.eq.f32.partialorder %v690, 8.507059e+37
        %v692 = vand.u32 %v638, 2147483648
        %v693 = vor.u32 1.1754944e-38, %v692
        %v694 = vsel %vm691, %v693, %v689
        %v695 = vmul.f32 %v618, %v694
        %v696 = vrcp.pop %v644
        %v697 = vmul.f32 %v644, %v696
        %v698 = vsub.f32 1.0, %v697
        %v699 = vmul.f32 %v696, %v698
        %v700 = vadd.f32 %v696, %v699
        %vm701 = vweird.f32 %v644
        %vm702 = vweird.f32 %v696
        %vm703 = vmor %vm701, %vm702
        %v704 = vsel %vm703, %v696, %v700
        %v705 = vand.u32 2147483647, %v644
        %vm706 = vcmp.eq.f32.partialorder %v705, 8.507059e+37
        %v707 = vand.u32 %v644, 2147483648
        %v708 = vor.u32 1.1754944e-38, %v707
        %v709 = vsel %vm706, %v708, %v704
        %v710 = vmul.f32 %v620, %v709
        %v711 = vrcp.pop %v650
        %v712 = vmul.f32 %v650, %v711
        %v713 = vsub.f32 1.0, %v712
        %v714 = vmul.f32 %v711, %v713
        %v715 = vadd.f32 %v711, %v714
        %vm716 = vweird.f32 %v650
        %vm717 = vweird.f32 %v711
        %vm718 = vmor %vm716, %vm717
        %v719 = vsel %vm718, %v711, %v715
        %v720 = vand.u32 2147483647, %v650
        %vm721 = vcmp.eq.f32.partialorder %v720, 8.507059e+37
        %v722 = vand.u32 %v650, 2147483648
        %v723 = vor.u32 1.1754944e-38, %v722
        %v724 = vsel %vm721, %v723, %v719
        %v725 = vmul.f32 %v622, %v724
        %v726 = vrcp.pop %v656
        %v727 = vmul.f32 %v656, %v726
        %v728 = vsub.f32 1.0, %v727
        %v729 = vmul.f32 %v726, %v728
        %v730 = vadd.f32 %v726, %v729
        %vm731 = vweird.f32 %v656
        %vm732 = vweird.f32 %v726
        %vm733 = vmor %vm731, %vm732
        %v734 = vsel %vm733, %v726, %v730
        %v735 = vand.u32 2147483647, %v656
        %vm736 = vcmp.eq.f32.partialorder %v735, 8.507059e+37
        %v737 = vand.u32 %v656, 2147483648
        %v738 = vor.u32 1.1754944e-38, %v737
        %v739 = vsel %vm736, %v738, %v734
        %v740 = vmul.f32 %v624, %v739
        %v741 = vrcp.pop %v662
        %v742 = vmul.f32 %v662, %v741
        %v743 = vsub.f32 1.0, %v742
        %v744 = vmul.f32 %v741, %v743
        %v745 = vadd.f32 %v741, %v744
        %vm746 = vweird.f32 %v662
        %vm747 = vweird.f32 %v741
        %vm748 = vmor %vm746, %vm747
        %v749 = vsel %vm748, %v741, %v745
        %v750 = vand.u32 2147483647, %v662
        %vm751 = vcmp.eq.f32.partialorder %v750, 8.507059e+37
        %v752 = vand.u32 %v662, 2147483648
        %v753 = vor.u32 1.1754944e-38, %v752
        %v754 = vsel %vm751, %v753, %v749
        %v755 = vmul.f32 %v626, %v754
        %v756 = vrcp.pop %v668
        %v757 = vmul.f32 %v668, %v756
        %v758 = vsub.f32 1.0, %v757
        %v759 = vmul.f32 %v756, %v758
        %v760 = vadd.f32 %v756, %v759
        %vm761 = vweird.f32 %v668
        %vm762 = vweird.f32 %v756
        %vm763 = vmor %vm761, %vm762
        %v764 = vsel %vm763, %v756, %v760
        %v765 = vand.u32 2147483647, %v668
        %vm766 = vcmp.eq.f32.partialorder %v765, 8.507059e+37
        %v767 = vand.u32 %v668, 2147483648
        %v768 = vor.u32 1.1754944e-38, %v767
        %v769 = vsel %vm766, %v768, %v764
        %v770 = vmul.f32 %v628, %v769
        %v771 = vrcp.pop %v674
        %v772 = vmul.f32 %v674, %v771
        %v773 = vsub.f32 1.0, %v772
        %v774 = vmul.f32 %v771, %v773
        %v775 = vadd.f32 %v771, %v774
        %vm776 = vweird.f32 %v674
        %vm777 = vweird.f32 %v771
        %vm778 = vmor %vm776, %vm777
        %v779 = vsel %vm778, %v771, %v775
        %v780 = vand.u32 2147483647, %v674
        %vm781 = vcmp.eq.f32.partialorder %v780, 8.507059e+37
        %v782 = vand.u32 %v674, 2147483648
        %v783 = vor.u32 1.1754944e-38, %v782
        %v784 = vsel %vm781, %v783, %v779
        %v785 = vmul.f32 %v630, %v784
        %v786 = vrcp.pop %v680
        %v787 = vmul.f32 %v680, %v786
        %v788 = vsub.f32 1.0, %v787
        %v789 = vmul.f32 %v786, %v788
        %v790 = vadd.f32 %v786, %v789
        %vm791 = vweird.f32 %v680
        %vm792 = vweird.f32 %v786
        %vm793 = vmor %vm791, %vm792
        %v794 = vsel %vm793, %v786, %v790
        %v795 = vand.u32 2147483647, %v680
        %vm796 = vcmp.eq.f32.partialorder %v795, 8.507059e+37
        %v797 = vand.u32 %v680, 2147483648
        %v798 = vor.u32 1.1754944e-38, %v797
        %v799 = vsel %vm796, %v798, %v794
        %v800 = vmul.f32 %v632, %v799
        %v801 = vmul.f32 %v695, %v349
        %v802 = vmul.f32 %v710, %v350
        %v803 = vmul.f32 %v725, %v351
        %v804 = vmul.f32 %v740, %v352
        %v805 = vmul.f32 %v755, %v353
        %v806 = vmul.f32 %v770, %v354
        %v807 = vmul.f32 %v785, %v355
        %v808 = vmul.f32 %v800, %v356
        %v809 = vsel %vm375, %v801, 0.0
        %v810 = vrot.slane %v809, 4
        %v811 = vadd.f32 %v809, %v810
        %v812 = vrot.slane %v811, 2
        %v813 = vadd.f32 %v811, %v812
        %v814 = vrot.slane %v813, 1
        %v815 = vadd.f32 %v813, %v814
        %v816 = vsel %vm375, %v802, 0.0
        %v817 = vrot.slane %v816, 4
        %v818 = vadd.f32 %v816, %v817
        %v819 = vrot.slane %v818, 2
        %v820 = vadd.f32 %v818, %v819
        %v821 = vrot.slane %v820, 1
        %v822 = vadd.f32 %v820, %v821
        %v823 = vsel %vm375, %v803, 0.0
        %v824 = vrot.slane %v823, 4
        %v825 = vadd.f32 %v823, %v824
        %v826 = vrot.slane %v825, 2
        %v827 = vadd.f32 %v825, %v826
        %v828 = vrot.slane %v827, 1
        %v829 = vadd.f32 %v827, %v828
        %v830 = vsel %vm375, %v804, 0.0
        %v831 = vrot.slane %v830, 4
        %v832 = vadd.f32 %v830, %v831
        %v833 = vrot.slane %v832, 2
        %v834 = vadd.f32 %v832, %v833
        %v835 = vrot.slane %v834, 1
        %v836 = vadd.f32 %v834, %v835
        %v837 = vsel %vm375, %v805, 0.0
        %v838 = vrot.slane %v837, 4
        %v839 = vadd.f32 %v837, %v838
        %v840 = vrot.slane %v839, 2
        %v841 = vadd.f32 %v839, %v840
        %v842 = vrot.slane %v841, 1
        %v843 = vadd.f32 %v841, %v842
        %v844 = vsel %vm375, %v806, 0.0
        %v845 = vrot.slane %v844, 4
        %v846 = vadd.f32 %v844, %v845
        %v847 = vrot.slane %v846, 2
        %v848 = vadd.f32 %v846, %v847
        %v849 = vrot.slane %v848, 1
        %v850 = vadd.f32 %v848, %v849
        %v851 = vsel %vm375, %v807, 0.0
        %v852 = vrot.slane %v851, 4
        %v853 = vadd.f32 %v851, %v852
        %v854 = vrot.slane %v853, 2
        %v855 = vadd.f32 %v853, %v854
        %v856 = vrot.slane %v855, 1
        %v857 = vadd.f32 %v855, %v856
        %v858 = vsel %vm375, %v808, 0.0
        %v859 = vrot.slane %v858, 4
        %v860 = vadd.f32 %v858, %v859
        %v861 = vrot.slane %v860, 2
        %v862 = vadd.f32 %v860, %v861
        %v863 = vrot.slane %v862, 1
        %v864 = vadd.f32 %v862, %v863
        %vm873 = vcmask 1041409
        %v874 = vsel %vm873, %v822, %v815
        %vm875 = vcmask 1042434
        %v876 = vsel %vm875, %v829, %v874
        %vm877 = vcmask 1043459
        %v878 = vsel %vm877, %v836, %v876
        %vm879 = vcmask 1044484
        %v880 = vsel %vm879, %v843, %v878
        %vm881 = vcmask 1045509
        %v882 = vsel %vm881, %v850, %v880
        %vm883 = vcmask 1046534
        %v884 = vsel %vm883, %v857, %v882
        %vm885 = vcmask 1047559
        %v886 = vsel %vm885, %v864, %v884
        %888 = vst.msk [vmem:[%s346] sm:$0xff] %vm375, %v886
        %v889 = vmul.f32 %v695, %v357
        %v890 = vmul.f32 %v710, %v358
        %v891 = vmul.f32 %v725, %v359
        %v892 = vmul.f32 %v740, %v360
        %v893 = vmul.f32 %v755, %v361
        %v894 = vmul.f32 %v770, %v362
        %v895 = vmul.f32 %v785, %v363
        %v896 = vmul.f32 %v800, %v364
        %v897 = vsel %vm375, %v889, 0.0
        %v898 = vrot.slane %v897, 4
        %v899 = vadd.f32 %v897, %v898
        %v900 = vrot.slane %v899, 2
        %v901 = vadd.f32 %v899, %v900
        %v902 = vrot.slane %v901, 1
        %v903 = vadd.f32 %v901, %v902
        %v904 = vsel %vm375, %v890, 0.0
        %v905 = vrot.slane %v904, 4
        %v906 = vadd.f32 %v904, %v905
        %v907 = vrot.slane %v906, 2
        %v908 = vadd.f32 %v906, %v907
        %v909 = vrot.slane %v908, 1
        %v910 = vadd.f32 %v908, %v909
        %v911 = vsel %vm375, %v891, 0.0
        %v912 = vrot.slane %v911, 4
        %v913 = vadd.f32 %v911, %v912
        %v914 = vrot.slane %v913, 2
        %v915 = vadd.f32 %v913, %v914
        %v916 = vrot.slane %v915, 1
        %v917 = vadd.f32 %v915, %v916
        %v918 = vsel %vm375, %v892, 0.0
        %v919 = vrot.slane %v918, 4
        %v920 = vadd.f32 %v918, %v919
        %v921 = vrot.slane %v920, 2
        %v922 = vadd.f32 %v920, %v921
        %v923 = vrot.slane %v922, 1
        %v924 = vadd.f32 %v922, %v923
        %v925 = vsel %vm375, %v893, 0.0
        %v926 = vrot.slane %v925, 4
        %v927 = vadd.f32 %v925, %v926
        %v928 = vrot.slane %v927, 2
        %v929 = vadd.f32 %v927, %v928
        %v930 = vrot.slane %v929, 1
        %v931 = vadd.f32 %v929, %v930
        %v932 = vsel %vm375, %v894, 0.0
        %v933 = vrot.slane %v932, 4
        %v934 = vadd.f32 %v932, %v933
        %v935 = vrot.slane %v934, 2
        %v936 = vadd.f32 %v934, %v935
        %v937 = vrot.slane %v936, 1
        %v938 = vadd.f32 %v936, %v937
        %v939 = vsel %vm375, %v895, 0.0
        %v940 = vrot.slane %v939, 4
        %v941 = vadd.f32 %v939, %v940
        %v942 = vrot.slane %v941, 2
        %v943 = vadd.f32 %v941, %v942
        %v944 = vrot.slane %v943, 1
        %v945 = vadd.f32 %v943, %v944
        %v946 = vsel %vm375, %v896, 0.0
        %v947 = vrot.slane %v946, 4
        %v948 = vadd.f32 %v946, %v947
        %v949 = vrot.slane %v948, 2
        %v950 = vadd.f32 %v948, %v949
        %v951 = vrot.slane %v950, 1
        %v952 = vadd.f32 %v950, %v951
        %v961 = vsel %vm873, %v910, %v903
        %v962 = vsel %vm875, %v917, %v961
        %v963 = vsel %vm877, %v924, %v962
        %v964 = vsel %vm879, %v931, %v963
        %v965 = vsel %vm881, %v938, %v964
        %v966 = vsel %vm883, %v945, %v965
        %v967 = vsel %vm885, %v952, %v966
        %968 = vrot.lane.b32.xlu0 %v967, 32
        %v969 = vpop.permute.xlu0 %968
        %vm971 = vcmask 523520
        %972 = vst.msk [vmem:[%s346] sm:$0xff] %vm971, %v969
        %s973 = sand.u32 %s171, 1
        %s974 = scalar_lea.sflag [#allocation4], %s973
        %s975 = sand.u32 %s171, 1
        %s976 = smul.addr %s975, 8
        %s977 = scalar_lea.vmem [#allocation10], %s976
        // Predicated region
        $region61: #{tpu_custom_call.1} parent=43 // pred_check
          %p978 = pneg %p181
        $region62: #{tpu_custom_call.1} parent=43 // pred_check_branch
          %980 = sbr.rel (%p978) target = $region64
        $region63: #{tpu_custom_call.1} parent=43 // pred_region
          %982 = vsyncadd %s974, 0
          %s983 = smul.addr %s27, 8
          %s984 = scalar_lea.hbm %s6, %s983
          %s986 = sshll.u32 %s977, 4
          %s987 = int_to_ptr.vmem [resolvable:$true] %s986
          %s988 = sshll.u32 %s984, 4
          %s989 = int_to_ptr.hbm [resolvable:$true] %s988
          %991 = dma.vmem_to_hbm [thread:$0]  %s987, 128, %s989, %s974
        $region64: #{tpu_custom_call.1} parent=43 // pred_fallthru
          _
      $region44: #{tpu_custom_call.1} parent=5 // pred_fallthru
        _
      %p992 = scmp.le.s32.totalorder 2, %s22
      // Predicated region
      $region65: #{tpu_custom_call.1} parent=5 // pred_check
        %p993 = pneg %p992
      $region66: #{tpu_custom_call.1} parent=5 // pred_check_branch
        %995 = sbr.rel (%p993) target = $region68
      $region67: #{tpu_custom_call.1} parent=5 // pred_region
        %s996 = ssub.s32 %s22, 2
        // Predicated region
        $region69: #{tpu_custom_call.1} parent=67 // pred_check
          %p997 = pneg %p187
        $region70: #{tpu_custom_call.1} parent=67 // pred_check_branch
          %999 = sbr.rel (%p997) target = $region72
        $region71: #{tpu_custom_call.1} parent=67 // pred_region
          %s1000 = sand.u32 %s172, 1
          %s1001 = scalar_lea.sflag [#allocation4], %s1000
          %s1002 = sand.u32 %s172, 1
          %s1003 = smul.addr %s1002, 8
          %s1004 = scalar_lea.vmem [#allocation10], %s1003
          %1006 = dma.done %s1001, 128
        $region72: #{tpu_custom_call.1} parent=67 // pred_fallthru
          _
      $region68: #{tpu_custom_call.1} parent=5 // pred_fallthru
        _
    $region6: #{tpu_custom_call.1} parent=1 // loop_footer
      %s26 = sadd.s32 1, %s22
    $region7: #{tpu_custom_call.1} parent=1 // loop_footer_branch
      %21 = sbr.rel target = $region3
    $region8: #{tpu_custom_call.1} parent=1 // loop_exit
      _
    %1007 = vsyncpa [#allocation3], 1
    %s1008 = scalar_lea.sflag [#allocation3], 1
    %1009 = vsyncpa %s1008, 1
    %1010 = vsyncpa [#allocation6], 1
    %s1011 = scalar_lea.sflag [#allocation6], 1
    %1012 = vsyncpa %s1011, 1
    %1013 = vsyncpa [#allocation9], 1
    %1014 = vsyncpa [#allocation4], 1
    %s1015 = scalar_lea.sflag [#allocation4], 1
    %1016 = vsyncpa %s1015, 1

</llo_original>
